<compile_context>
chip_gen: v5e
topology: v5e:2x2
jax: 0.10.0
libtpu: 0.0.40
codegen_flags: <defaults>
</compile_context>

<pallas_src>
import numpy as np

import jax
import jax.numpy as jnp
from jax.experimental import pallas as pl
from jax.experimental.pallas import tpu as pltpu


def _round_up(x, m):
    return (x + m - 1) // m * m


# ---------------------------------------------------------------------------
# Kernels
# ---------------------------------------------------------------------------
def _fused_kernel(gid_ref, x_ref, w_ref, b_ref, o_ref):
    """z = x @ W_eff[subj] + b_eff[subj]  (one MXU pass, f32 accumulate, cast on store)."""
    del gid_ref  # consumed only by the BlockSpec index_maps
    acc = jnp.dot(x_ref[...], w_ref[...], preferred_element_type=jnp.float32)
    o_ref[...] = (acc + b_ref[...]).astype(o_ref.dtype)


def _two_stage_kernel(gid_ref, x_ref, wc_ref, bc_ref, ws_ref, bs_ref, o_ref):
    """y = x @ Wc^T + bc ; z = y @ Ws[subj]^T + bs[subj]  (Wc resident, small Ws swapped)."""
    del gid_ref
    y = jnp.dot(x_ref[...], wc_ref[...], preferred_element_type=jnp.float32)
    ws = ws_ref[...]
    y = (y + bc_ref[...]).astype(ws.dtype)
    acc = jnp.dot(y, ws, preferred_element_type=jnp.float32)
    o_ref[...] = (acc + bs_ref[...]).astype(o_ref.dtype)


# ---------------------------------------------------------------------------
# pallas_call wrappers
# ---------------------------------------------------------------------------
def grouped_matmul_fused(x_rows, tile_gid, w_eff, b_eff, *, tile_m, tile_n,
                         n_groups, out_dtype, vmem_limit_bytes):
    M_pad, D_in_pad = x_rows.shape
    _, _, D_out_pad = w_eff.shape
    num_m = M_pad // tile_m
    num_n = D_out_pad // tile_n
    out_itemsize = jnp.dtype(out_dtype).itemsize

    cost = pl.CostEstimate(
        flops=2 * M_pad * D_in_pad * D_out_pad,
        transcendentals=0,
        bytes_accessed=int(num_n * x_rows.size * x_rows.dtype.itemsize
                           + num_n * n_groups * (D_in_pad * tile_n * 2 + tile_n * 4)
                           + M_pad * D_out_pad * out_itemsize),
    )

    # Deep-buffer the weight stream only when the grid is deep enough to profit from it.
    wmode = dict(pipeline_mode=pl.Buffered(3)) if num_m > 2 else {}

    grid_spec = pltpu.PrefetchScalarGridSpec(
        num_scalar_prefetch=1,
        # m innermost: consecutive steps inside one subject group keep the same weight block
        # index, so Pallas skips the weight DMA for those steps.
        grid=(num_n, num_m),
        in_specs=[
            pl.BlockSpec((tile_m, D_in_pad), lambda n, m, gid: (m, 0)),
            pl.BlockSpec((pl.Squeezed(), D_in_pad, tile_n),
                         lambda n, m, gid: (gid[m], 0, n), **wmode),
            pl.BlockSpec((pl.Squeezed(), 1, tile_n),
                         lambda n, m, gid: (gid[m], 0, n), **wmode),
        ],
        out_specs=pl.BlockSpec((tile_m, tile_n), lambda n, m, gid: (m, n)),
    )

    return pl.pallas_call(
        _fused_kernel,
        out_shape=jax.ShapeDtypeStruct((M_pad, D_out_pad), out_dtype),
        grid_spec=grid_spec,
        compiler_params=pltpu.CompilerParams(
            dimension_semantics=("parallel", "parallel"),
            vmem_limit_bytes=vmem_limit_bytes),
        cost_estimate=cost,
    )(tile_gid, x_rows, w_eff, b_eff)


def grouped_matmul_two_stage(x_rows, tile_gid, wc_t, bc, ws_t, bs, *, tile_m,
                             n_groups, out_dtype, vmem_limit_bytes):
    M_pad, D_in_pad = x_rows.shape
    _, D_out_pad, _ = ws_t.shape
    num_m = M_pad // tile_m
    out_itemsize = jnp.dtype(out_dtype).itemsize

    cost = pl.CostEstimate(
        flops=2 * M_pad * D_out_pad * (D_in_pad + D_out_pad),
        transcendentals=0,
        bytes_accessed=int(x_rows.size * x_rows.dtype.itemsize
                           + D_in_pad * D_out_pad * 2
                           + n_groups * (D_out_pad * D_out_pad * 2 + D_out_pad * 4)
                           + M_pad * D_out_pad * out_itemsize),
    )

    wmode = dict(pipeline_mode=pl.Buffered(3)) if num_m > 2 else {}

    grid_spec = pltpu.PrefetchScalarGridSpec(
        num_scalar_prefetch=1,
        grid=(num_m,),
        in_specs=[
            pl.BlockSpec((tile_m, D_in_pad), lambda m, gid: (m, 0)),
            pl.BlockSpec((D_in_pad, D_out_pad), lambda m, gid: (0, 0)),   # resident Wc^T
            pl.BlockSpec((1, D_out_pad), lambda m, gid: (0, 0)),
            pl.BlockSpec((pl.Squeezed(), D_out_pad, D_out_pad),
                         lambda m, gid: (gid[m], 0, 0), **wmode),
            pl.BlockSpec((pl.Squeezed(), 1, D_out_pad),
                         lambda m, gid: (gid[m], 0, 0), **wmode),
        ],
        out_specs=pl.BlockSpec((tile_m, D_out_pad), lambda m, gid: (m, 0)),
    )

    return pl.pallas_call(
        _two_stage_kernel,
        out_shape=jax.ShapeDtypeStruct((M_pad, D_out_pad), out_dtype),
        grid_spec=grid_spec,
        compiler_params=pltpu.CompilerParams(
            dimension_semantics=("parallel",),
            vmem_limit_bytes=vmem_limit_bytes),
        cost_estimate=cost,
    )(tile_gid, x_rows, wc_t, bc, ws_t, bs)


# ---------------------------------------------------------------------------
# Host-side weight prep (done once, hoisted out of the forward path)
# ---------------------------------------------------------------------------
def prepare_params(Wc, bc, Ws, bs, compute_dtype=jnp.bfloat16, fuse=None):
    """Pad to lane multiples, cast to the MXU dtype, and (optionally) fold comm_lin into the
    per-subject weights.  Wc: (D_out, D_in)  bc: (D_out,)  Ws: (n_subj, D_out, D_out)."""
    D_out, D_in = Wc.shape
    n_subj = Ws.shape[0]
    D_in_pad = _round_up(D_in, 128)
    D_out_pad = _round_up(D_out, 128)
    if fuse is None:
        # Folding Wc into every subject turns the per-subject block from D_out_pad^2 into
        # D_in_pad*D_out_pad bytes of weight DMA -> only fuse when the blow-up is modest.
        fuse = D_in_pad <= 2 * D_out_pad

    params = dict(d_in=D_in, d_out=D_out, d_in_pad=D_in_pad, d_out_pad=D_out_pad,
                  n_subj=n_subj, compute_dtype=compute_dtype, fused=bool(fuse))

    if fuse:
        # W_eff[s][i, p] = sum_o Wc[o, i] * Ws[s][p, o]   (f32 accumulation, cast once)
        w_eff = jnp.einsum("oi,spo->sip", Wc, Ws)            # (n_subj, D_in, D_out)
        b_eff = jnp.einsum("o,spo->sp", bc, Ws) + bs         # (n_subj, D_out)
        w_eff = jnp.pad(w_eff, ((0, 0), (0, D_in_pad - D_in), (0, D_out_pad - D_out)))
        b_eff = jnp.pad(b_eff, ((0, 0), (0, D_out_pad - D_out)))
        params["w_eff"] = w_eff.astype(compute_dtype)
        params["b_eff"] = b_eff[:, None, :].astype(jnp.float32)      # (n_subj, 1, D_out_pad)
    else:
        wc_t = jnp.pad(Wc.T, ((0, D_in_pad - D_in), (0, D_out_pad - D_out)))
        bc_p = jnp.pad(bc, (0, D_out_pad - D_out))
        ws_t = jnp.pad(jnp.swapaxes(Ws, 1, 2),
                       ((0, 0), (0, D_out_pad - D_out), (0, D_out_pad - D_out)))
        bs_p = jnp.pad(bs, ((0, 0), (0, D_out_pad - D_out)))
        params["wc_t"] = wc_t.astype(compute_dtype)
        params["bc"] = bc_p[None, :].astype(jnp.float32)             # (1, D_out_pad)
        params["ws_t"] = ws_t.astype(compute_dtype)
        params["bs"] = bs_p[:, None, :].astype(jnp.float32)          # (n_subj, 1, D_out_pad)
    return params


# ---------------------------------------------------------------------------
# Tile selection with an explicit VMEM budget (v5e 16 MiB default, v7x 64 MiB physical)
# ---------------------------------------------------------------------------
_VMEM_SOFT_LIMIT = 12 * 1024 * 1024    # below v5e's 16 MiB default scoped VMEM
_VMEM_HARD_LIMIT = 48 * 1024 * 1024    # below v7x's 64 MiB physical VMEM


def _fused_vmem_need(tile_m, tile_n, D_in_pad, out_itemsize):
    return (2 * tile_m * D_in_pad * 2          # double-buffered bf16 LHS
            + 3 * D_in_pad * tile_n * 2        # (up to) Buffered(3) bf16 weight block
            + 3 * tile_n * 4                   # bias
            + 2 * tile_m * tile_n * out_itemsize)


def _two_stage_vmem_need(tile_m, D_in_pad, D_out_pad, out_itemsize):
    return (2 * tile_m * D_in_pad * 2
            + 2 * D_in_pad * D_out_pad * 2     # resident Wc^T
            + 2 * D_out_pad * 4
            + 3 * D_out_pad * D_out_pad * 2    # per-subject block
            + 3 * D_out_pad * 4
            + 2 * tile_m * D_out_pad * out_itemsize)


def _select_tiles(n_rows, D_in_pad, D_out_pad, out_itemsize, fused, tile_m_max=256):
    # tile_m: multiple of 16 (bf16 sublane packing), MXU-sized when the batch allows.
    tile_m = max(16, min(tile_m_max, _round_up(n_rows, 16)))

    if fused:
        # Prefer one full-width N tile (x read exactly once, wide unmasked stores); shrink
        # only when the VMEM budget demands it.
        cands = [c for c in (D_out_pad, 512, 256, 128)
                 if c <= D_out_pad and D_out_pad % c == 0]
        tile_n = cands[-1]
        for c in cands:
            if _fused_vmem_need(tile_m, c, D_in_pad, out_itemsize) <= _VMEM_HARD_LIMIT:
                tile_n = c
                break
        while (_fused_vmem_need(tile_m, tile_n, D_in_pad, out_itemsize) > _VMEM_HARD_LIMIT
               and tile_m > 16):
            tile_m = max(16, tile_m // 2)
        need = _fused_vmem_need(tile_m, tile_n, D_in_pad, out_itemsize)
    else:
        tile_n = D_out_pad                     # intermediate y needs the full D_out extent
        while (_two_stage_vmem_need(tile_m, D_in_pad, D_out_pad, out_itemsize)
               > _VMEM_HARD_LIMIT and tile_m > 16):
            tile_m = max(16, tile_m // 2)
        need = _two_stage_vmem_need(tile_m, D_in_pad, D_out_pad, out_itemsize)

    vmem_limit = int(min(_VMEM_HARD_LIMIT, 2 * need)) if need > _VMEM_SOFT_LIMIT else None
    return tile_m, tile_n, vmem_limit


# ---------------------------------------------------------------------------
# Host-side group planning (composed gather maps, static bucketed grid)
# ---------------------------------------------------------------------------
def _plan_groups(idx_np, rows_per_elem, tile_m, min_tiles=2):
    """Group flat rows by subject, pad each group to a multiple of tile_m, bucket the tile
    count to a static power of two (>= 2), and emit composed src/dst gather maps."""
    B = idx_np.shape[0]
    T = rows_per_elem
    order = np.argsort(idx_np, kind="stable")
    sorted_idx = idx_np[order]

    flat_src = []                                  # padded row -> original flat row
    flat_dst = np.zeros(B * T, dtype=np.int32)     # original flat row -> padded row
    tile_gid = []                                  # subject index per M tile
    n_groups = 0
    pad_base = 0
    start = 0
    while start < B:
        stop = start
        while stop < B and sorted_idx[stop] == sorted_idx[start]:
            stop += 1
        subj = int(sorted_idx[start])
        g_rows = (stop - start) * T
        n_tiles = -(-g_rows // tile_m)
        tile_gid.extend([subj] * n_tiles)
        n_groups += 1
        for r in range(n_tiles * tile_m):
            if r < g_rows:
                src = int(order[start + r // T]) * T + (r % T)
                flat_dst[src] = pad_base + r
                flat_src.append(src)
            else:
                flat_src.append(flat_src[-1])      # duplicate a real row; output is dropped
        pad_base += n_tiles * tile_m
        start = stop

    # Bucket the number of M tiles: >= 2 keeps both v7x TensorCores busy; power-of-two
    # buckets keep the pallas_call grid static across batches -> no per-batch recompiles.
    num_m = max(min_tiles, 1 << (len(tile_gid) - 1).bit_length())
    extra = num_m - len(tile_gid)
    if extra:
        tile_gid.extend([int(sorted_idx[0])] * extra)   # any valid subject; rows are dummies
        flat_src.extend([0] * (extra * tile_m))
    return (np.asarray(flat_src, np.int32), flat_dst,
            np.asarray(tile_gid, np.int32), n_groups)


# ---------------------------------------------------------------------------
# Forward (mirrors SubjLinear.forward, eval mode)
# ---------------------------------------------------------------------------
def subj_linear_apply(x, subj_id, subject_ids, params, tile_m_max=256):
    """x: [B, T, D_in] or [B, D_in]; subj_id: scalar id or per-element list of ids."""
    squeeze_tokens = (x.ndim == 2)
    if squeeze_tokens:
        x = x[:, None, :]
    B, T, D_in = x.shape
    assert D_in == params["d_in"]
    D_out = params["d_out"]
    D_in_pad, D_out_pad = params["d_in_pad"], params["d_out_pad"]
    compute_dtype = params["compute_dtype"]
    out_dtype = compute_dtype          # bf16 store halves the lane-padded output writeback

    id_to_idx = {sid: i for i, sid in enumerate(subject_ids)}
    if isinstance(subj_id, (list, tuple)):
        assert len(subj_id) == B
        idx_np = np.asarray([id_to_idx[s] for s in subj_id], dtype=np.int32)
    else:
        idx_np = np.full((B,), id_to_idx[subj_id], dtype=np.int32)

    tile_m, tile_n, vmem_limit = _select_tiles(
        B * T, D_in_pad, D_out_pad, jnp.dtype(out_dtype).itemsize,
        fused=params["fused"], tile_m_max=tile_m_max)

    flat_src, flat_dst, tile_gid, n_groups = _plan_groups(idx_np, T, tile_m)

    # One composed input gather (sort-by-subject + per-group padding), pad + cast fused in.
    x_rows = x.reshape(B * T, D_in)[flat_src]
    if D_in_pad > D_in:
        x_rows = jnp.pad(x_rows, ((0, 0), (0, D_in_pad - D_in)))
    x_rows = x_rows.astype(compute_dtype)
    tile_gid_j = jnp.asarray(tile_gid)

    if params["fused"]:
        out_pad = grouped_matmul_fused(
            x_rows, tile_gid_j, params["w_eff"], params["b_eff"],
            tile_m=tile_m, tile_n=tile_n, n_groups=n_groups,
            out_dtype=out_dtype, vmem_limit_bytes=vmem_limit)
    else:
        out_pad = grouped_matmul_two_stage(
            x_rows, tile_gid_j, params["wc_t"], params["bc"],
            params["ws_t"], params["bs"],
            tile_m=tile_m, n_groups=n_groups,
            out_dtype=out_dtype, vmem_limit_bytes=vmem_limit)

    # One composed output gather (un-pad + un-sort).
    out = out_pad[flat_dst, :D_out].reshape(B, T, D_out)
    if squeeze_tokens:
        out = out[:, 0, :]
    return out.astype(x.dtype)


# ---------------------------------------------------------------------------
# Synthetic params + reference
# ---------------------------------------------------------------------------
def make_params(key, input_dim, output_dim, subject_ids):
    """Deterministic synthetic params mimicking nn.Linear shapes."""
    k = jax.random.split(key, 2 + 2 * len(subject_ids))
    bound_c = 1.0 / (input_dim ** 0.5)
    Wc = jax.random.uniform(k[0], (output_dim, input_dim), jnp.float32,
                            minval=-bound_c, maxval=bound_c)
    bc = jax.random.uniform(k[1], (output_dim,), jnp.float32,
                            minval=-bound_c, maxval=bound_c)
    bound_s = 1.0 / (output_dim ** 0.5)
    Ws, bs = [], []
    for i, _ in enumerate(subject_ids):
        Ws.append(jax.random.uniform(k[2 + 2 * i], (output_dim, output_dim),
                                     jnp.float32, minval=-bound_s, maxval=bound_s))
        bs.append(jax.random.uniform(k[3 + 2 * i], (output_dim,),
                                     jnp.float32, minval=-bound_s, maxval=bound_s))
    return Wc, bc, jnp.stack(Ws), jnp.stack(bs)


def _reference(x, idx, Wc, bc, Ws, bs):
    y = jnp.einsum("btd,od->bto", x, Wc) + bc
    return jnp.einsum("bto,bpo->btp", y, Ws[idx]) + bs[idx][:, None, :]


if __name__ == "__main__":
    key = jax.random.PRNGKey(0)
    B, T, D_in, D_out = 2, 8, 32, 32
    subject_ids = [3, 7, 11]

    k_x, k_p = jax.random.split(key)
    x = jax.random.normal(k_x, (B, T, D_in), dtype=jnp.float32)
    Wc, bc, Ws, bs = make_params(k_p, D_in, D_out, subject_ids)

    # One-time weight prep, hoisted out of the forward path.
    params_fused = prepare_params(Wc, bc, Ws, bs)                # heuristic -> fused here
    params_2stage = prepare_params(Wc, bc, Ws, bs, fuse=False)   # exercise the gated path too

    subj_list = [7, 11]
    idx_list = jnp.asarray([1, 2], jnp.int32)
    ref_list = _reference(x, idx_list, Wc, bc, Ws, bs)

    # 1) fused grouped kernel, per-element subject list (3-D activations)
    out_f = jax.block_until_ready(subj_linear_apply(x, subj_list, subject_ids, params_fused))
    assert jnp.allclose(out_f, ref_list, atol=5e-2, rtol=5e-2), \
        float(jnp.max(jnp.abs(out_f - ref_list)))

    # 2) two-stage grouped kernel (Wc resident, per-subject Ws swapped), same inputs
    out_t = jax.block_until_ready(subj_linear_apply(x, subj_list, subject_ids, params_2stage))
    assert jnp.allclose(out_t, ref_list, atol=5e-2, rtol=5e-2), \
        float(jnp.max(jnp.abs(out_t - ref_list)))

    # 3) single shared subject on 2-D activations (the EEGEncoder repr-head case)
    x2d = x[:, 0, :]
    out_s = jax.block_until_ready(subj_linear_apply(x2d, 3, subject_ids, params_fused))
    ref_s = _reference(x2d[:, None, :], jnp.asarray([0, 0], jnp.int32),
                       Wc, bc, Ws, bs)[:, 0, :]
    assert jnp.allclose(out_s, ref_s, atol=5e-2, rtol=5e-2), \
        float(jnp.max(jnp.abs(out_s - ref_s)))

    print("KERNEL_OK")
</pallas_src>

<mosaic_0001>
module attributes {stable_mosaic.version = 11 : i64} {
  func.func @_fused_kernel(%arg0: i32, %arg1: i32, %arg2: memref<2xi32, #tpu.memory_space<smem>>, %arg3: memref<16x128xbf16, #tpu.memory_space<vmem>>, %arg4: memref<1x128x128xbf16, #tpu.memory_space<vmem>>, %arg5: memref<1x1x128xf32, #tpu.memory_space<vmem>>, %arg6: memref<16x128xbf16, #tpu.memory_space<vmem>>) attributes {dimension_semantics = [#tpu.dimension_semantics<parallel>, #tpu.dimension_semantics<parallel>], iteration_bounds = array<i64: 1, 2>, scalar_prefetch = 1 : i64, scratch_operands = 0 : i64, tpu.core_type = #tpu.core_type<tc>, window_params = [{transform_indices = @transform_0, window_bounds = array<i64: 16, 128>}, {transform_indices = @transform_1, window_bounds = array<i64: 1, 128, 128>}, {transform_indices = @transform_2, window_bounds = array<i64: 1, 1, 128>}, {transform_indices = @transform_3, window_bounds = array<i64: 16, 128>}]} {
    %c0 = arith.constant 0 : index
    %c0_0 = arith.constant 0 : index
    %0 = vector.load %arg3[%c0, %c0_0] : memref<16x128xbf16, #tpu.memory_space<vmem>>, vector<16x128xbf16>
    %c0_1 = arith.constant 0 : index
    %c0_2 = arith.constant 0 : index
    %c0_3 = arith.constant 0 : index
    %1 = vector.load %arg4[%c0_1, %c0_2, %c0_3] : memref<1x128x128xbf16, #tpu.memory_space<vmem>>, vector<1x128x128xbf16>
    %2 = vector.shape_cast %1 : vector<1x128x128xbf16> to vector<128x128xbf16>
    %cst = arith.constant dense<0.000000e+00> : vector<16x128xf32>
    %3 = tpu.matmul %0, %2, %cst {dimension_numbers = #tpu.dot_dimension_numbers<[1], [0], [0], [1], [0, 0, 1, 1], [], []>} : vector<16x128xbf16>, vector<128x128xbf16>, vector<16x128xf32> -> vector<16x128xf32>
    %c0_4 = arith.constant 0 : index
    %c0_5 = arith.constant 0 : index
    %c0_6 = arith.constant 0 : index
    %4 = vector.load %arg5[%c0_4, %c0_5, %c0_6] : memref<1x1x128xf32, #tpu.memory_space<vmem>>, vector<1x1x128xf32>
    %5 = vector.shape_cast %4 : vector<1x1x128xf32> to vector<1x128xf32>
    %6 = vector.broadcast %5 : vector<1x128xf32> to vector<16x128xf32>
    %7 = arith.addf %3, %6 : vector<16x128xf32>
    %8 = arith.truncf %7 : vector<16x128xf32> to vector<16x128xbf16>
    %c0_7 = arith.constant 0 : index
    %c0_8 = arith.constant 0 : index
    %9 = vector.load %arg6[%c0_7, %c0_8] : memref<16x128xbf16, #tpu.memory_space<vmem>>, vector<16x128xbf16>
    tpu.vector_store %arg6[%c0_7, %c0_8], %8 {strides = array<i32>} : memref<16x128xbf16, #tpu.memory_space<vmem>>, vector<16x128xbf16>,
    return
  }
  func.func @transform_0(%arg0: i32, %arg1: i32, %arg2: memref<2xi32, #tpu.memory_space<smem>>) -> (i32, i32) {
    %c0_i32 = arith.constant 0 : i32
    %c0_i32_0 = arith.constant 0 : i32
    return %arg1, %c0_i32 : i32, i32
  }
  func.func @transform_1(%arg0: i32, %arg1: i32, %arg2: memref<2xi32, #tpu.memory_space<smem>>) -> (i32, i32, i32) {
    %0 = arith.index_cast %arg1 : i32 to index
    %1 = memref.load %arg2[%0] : memref<2xi32, #tpu.memory_space<smem>>
    %c0_i32 = arith.constant 0 : i32
    %c0_i32_0 = arith.constant 0 : i32
    return %1, %c0_i32, %arg0 : i32, i32, i32
  }
  func.func @transform_2(%arg0: i32, %arg1: i32, %arg2: memref<2xi32, #tpu.memory_space<smem>>) -> (i32, i32, i32) {
    %0 = arith.index_cast %arg1 : i32 to index
    %1 = memref.load %arg2[%0] : memref<2xi32, #tpu.memory_space<smem>>
    %c0_i32 = arith.constant 0 : i32
    %c0_i32_0 = arith.constant 0 : i32
    return %1, %c0_i32, %arg0 : i32, i32, i32
  }
  func.func @transform_3(%arg0: i32, %arg1: i32, %arg2: memref<2xi32, #tpu.memory_space<smem>>) -> (i32, i32) {
    %c0_i32 = arith.constant 0 : i32
    return %arg1, %arg0 : i32, i32
  }
}

</mosaic_0001>

<llo_original>
// kernel: tpu_custom_call.1
$region0: #{tpu_custom_call.1}
  #allocation0 [shape = 'u32[]', space=smem, size = 0x4, offset = 0x4, fixed_abs, tag = 'smem constant byte address 0x4 - core index']
  #allocation1 [shape = 'u32[72,128]{1,0:T(1,128)}', space=vmem, size = 0x9000, scoped, tag = 'internal scratch']
  #allocation2 [shape = 's32[1]{0}', space=sflag, size = 0x4, scoped, tag = 'scoped memory for tpu_custom_call.1']
  #allocation3 [shape = 'u8[512]{0}', space=smem, size = 0x200, scoped, tag = 'prefetched SMEM operand 0']
  %s0 = inlined_call_operand.hbm [shape: s32[2], index: 0, kind: input, shape index: {}]
  %s1 = inlined_call_operand.hbm [shape: bf16[32,128], index: 1, kind: input, shape index: {}]
  %s2 = inlined_call_operand.hbm [shape: bf16[3,128,128], index: 2, kind: input, shape index: {}]
  %s3 = inlined_call_operand.hbm [shape: f32[3,1,128], index: 3, kind: input, shape index: {}]
  %s4 = inlined_call_operand.hbm [shape: bf16[32,128], index: 4, kind: output, shape index: {}]
  %s5 = sld [smem:[#allocation0]]
  $region57: #{tpu_custom_call.1} parent=0
    _
  %s7 = ssub.s32 1, %s5
  %s8 = scalar_select 0, %s7, %s5
  %s10 = sshll.u32 %s0, 4
  %s11 = int_to_ptr.hbm [resolvable:$true] %s10
  %13 = dma.hbm_to_smem %s11, 16, [#allocation3], [#allocation2]
  %15 = dma.done [#allocation2], 16
  %16 = sfence
  $region1: #{tpu_custom_call.1} parent=0
    #allocation4 [shape = 'u8[8192]{0}', space=vmem, size = 0x2000, scoped, tag = 'input window, operand 1']
    #allocation5 [shape = 's32[2]{0}', space=sflag, size = 0x8, scoped, tag = 'scoped memory for tpu_custom_call.1']
    #allocation6 [shape = 's32[2]{0}', space=sflag, size = 0x8, scoped, tag = 'scoped memory for tpu_custom_call.1']
    #allocation7 [shape = 'u8[65536]{0}', space=vmem, size = 0x10000, scoped, tag = 'input window, operand 2']
    #allocation8 [shape = 's32[2]{0}', space=sflag, size = 0x8, scoped, tag = 'scoped memory for tpu_custom_call.1']
    #allocation9 [shape = 'u8[1024]{0}', space=vmem, size = 0x400, scoped, tag = 'input window, operand 3']
    #allocation10 [shape = 'u8[8192]{0}', space=vmem, size = 0x2000, scoped, tag = 'output window, operand 0']
    %17 = vsyncpa [#allocation5], 0
    %s18 = scalar_lea.sflag [#allocation5], 1
    %19 = vsyncpa %s18, 0
    %20 = vsyncpa [#allocation8], 0
    %s21 = scalar_lea.sflag [#allocation8], 1
    %22 = vsyncpa %s21, 0
    %23 = vsyncpa [#allocation6], 0
    %s24 = scalar_lea.sflag [#allocation6], 1
    %25 = vsyncpa %s24, 0
    loop: start=0, step=1, limit=4
    $region2: #{tpu_custom_call.1} parent=1 // loop_pre_header
      _
    $region3: #{tpu_custom_call.1} parent=1 // loop_header
      %s27 = sphi 0, %s31
      %p28 = scmp.ge.s32.totalorder %s27, 4
      %s34 = sphi 0, %s46
      %s35 = sphi 0, %s42
      %s36 = sphi 0, %s34
      %s37 = sphi 0, %s35
      %s38 = sphi 0, %s36
      %s39 = sphi 0, %s37
      %s49 = sphi 0, %s51
      %s52 = sphi 0, %s49
      %s53 = sphi 0, %s52
      %s69 = sphi 0, %s53
      %s79 = sphi 0, %s81
      %s82 = sphi 0, %s79
      %s83 = sphi 0, %s82
      %s99 = sphi 0, %s83
      %s109 = sphi 0, %s111
      %s112 = sphi 0, %s109
      %s113 = sphi 0, %s112
      %s129 = sphi 0, %s113
      %s137 = sphi 0, %s139
      %s140 = sphi 0, %s137
      %s141 = sphi 0, %s140
      %s157 = sphi 0, %s141
    $region4: #{tpu_custom_call.1} parent=1 // loop_header_branch
      %30 = sbr.rel (%p28) target = $region8
    $region5: #{tpu_custom_call.1} parent=1 // loop_body
      %s32 = ssub.s32 %s27, 1
      %s33 = ssub.s32 %s27, 2
      %s40 = sadd.s32 1, %s35
      %p41 = scmp.ge.s32.totalorder %s40, 2
      %s42 = scalar_select %p41, 0, %s40
      %s43 = sadd.s32 1, %s34
      %s44 = scalar_select %p41, %s43, %s34
      %p45 = scmp.ge.s32.totalorder %s44, 1
      %s46 = scalar_select %p45, 0, %s44
      %s47 = ssub.s32 %s35, %s42
      %p48 = scmp.eq.s32.totalorder %s47, 0
      %s50 = sadd.s32 %s49, 1
      %s51 = scalar_select %p48, %s49, %s50
      %p54 = pneg %p48
      %p55 = scmp.eq.s32.totalorder %s27, 1
      %p56 = por %p54, %p55
      %p57 = scmp.ne.s32.totalorder %s49, %s52
      %p58 = scmp.eq.s32.totalorder %s27, 0
      %p59 = por %p57, %p58
      %p60 = scmp.ne.s32.totalorder %s49, %s52
      %p61 = scmp.eq.s32.totalorder %s32, 1
      %p62 = por %p60, %p61
      %p63 = scmp.ne.s32.totalorder %s52, %s53
      %p64 = scmp.eq.s32.totalorder %s32, 0
      %p65 = por %p63, %p64
      %p66 = scmp.ne.s32.totalorder %s52, %s53
      %p67 = scmp.eq.s32.totalorder %s33, 1
      %p68 = por %p66, %p67
      %p70 = scmp.ne.s32.totalorder %s53, %s69
      %p71 = scmp.eq.s32.totalorder %s33, 0
      %p72 = por %p70, %p71
      %s73 = sld [smem:[#allocation3 + %s35]]
      %s74 = sld [smem:[#allocation3 + %s42]]
      %s75 = ssub.s32 %s73, %s74
      %s76 = ssub.s32 %s34, %s46
      %s77 = sor.u32 %s75, %s76
      %p78 = scmp.eq.s32.totalorder %s77, 0
      %s80 = sadd.s32 %s79, 1
      %s81 = scalar_select %p78, %s79, %s80
      %p84 = pneg %p78
      %p85 = scmp.eq.s32.totalorder %s27, 1
      %p86 = por %p84, %p85
      %p87 = scmp.ne.s32.totalorder %s79, %s82
      %p88 = scmp.eq.s32.totalorder %s27, 0
      %p89 = por %p87, %p88
      %p90 = scmp.ne.s32.totalorder %s79, %s82
      %p91 = scmp.eq.s32.totalorder %s32, 1
      %p92 = por %p90, %p91
      %p93 = scmp.ne.s32.totalorder %s82, %s83
      %p94 = scmp.eq.s32.totalorder %s32, 0
      %p95 = por %p93, %p94
      %p96 = scmp.ne.s32.totalorder %s82, %s83
      %p97 = scmp.eq.s32.totalorder %s33, 1
      %p98 = por %p96, %p97
      %p100 = scmp.ne.s32.totalorder %s83, %s99
      %p101 = scmp.eq.s32.totalorder %s33, 0
      %p102 = por %p100, %p101
      %s103 = sld [smem:[#allocation3 + %s35]]
      %s104 = sld [smem:[#allocation3 + %s42]]
      %s105 = ssub.s32 %s103, %s104
      %s106 = ssub.s32 %s34, %s46
      %s107 = sor.u32 %s105, %s106
      %p108 = scmp.eq.s32.totalorder %s107, 0
      %s110 = sadd.s32 %s109, 1
      %s111 = scalar_select %p108, %s109, %s110
      %p114 = pneg %p108
      %p115 = scmp.eq.s32.totalorder %s27, 1
      %p116 = por %p114, %p115
      %p117 = scmp.ne.s32.totalorder %s109, %s112
      %p118 = scmp.eq.s32.totalorder %s27, 0
      %p119 = por %p117, %p118
      %p120 = scmp.ne.s32.totalorder %s109, %s112
      %p121 = scmp.eq.s32.totalorder %s32, 1
      %p122 = por %p120, %p121
      %p123 = scmp.ne.s32.totalorder %s112, %s113
      %p124 = scmp.eq.s32.totalorder %s32, 0
      %p125 = por %p123, %p124
      %p126 = scmp.ne.s32.totalorder %s112, %s113
      %p127 = scmp.eq.s32.totalorder %s33, 1
      %p128 = por %p126, %p127
      %p130 = scmp.ne.s32.totalorder %s113, %s129
      %p131 = scmp.eq.s32.totalorder %s33, 0
      %p132 = por %p130, %p131
      %s133 = ssub.s32 %s35, %s42
      %s134 = ssub.s32 %s34, %s46
      %s135 = sor.u32 %s133, %s134
      %p136 = scmp.eq.s32.totalorder %s135, 0
      %s138 = sadd.s32 %s137, 1
      %s139 = scalar_select %p136, %s137, %s138
      %p142 = pneg %p136
      %p143 = scmp.eq.s32.totalorder %s27, 1
      %p144 = por %p142, %p143
      %p145 = scmp.ne.s32.totalorder %s137, %s140
      %p146 = scmp.eq.s32.totalorder %s27, 0
      %p147 = por %p145, %p146
      %p148 = scmp.ne.s32.totalorder %s137, %s140
      %p149 = scmp.eq.s32.totalorder %s32, 1
      %p150 = por %p148, %p149
      %p151 = scmp.ne.s32.totalorder %s140, %s141
      %p152 = scmp.eq.s32.totalorder %s32, 0
      %p153 = por %p151, %p152
      %p154 = scmp.ne.s32.totalorder %s140, %s141
      %p155 = scmp.eq.s32.totalorder %s33, 1
      %p156 = por %p154, %p155
      %p158 = scmp.ne.s32.totalorder %s141, %s157
      %p159 = scmp.eq.s32.totalorder %s33, 0
      %p160 = por %p158, %p159
      %p161 = scmp.le.s32.totalorder 1, %s27
      %p162 = scmp.lt.s32.totalorder %s27, 3
      %p163 = pnand %p161, %p162
      %p164 = pneg %p163
      // Predicated region
      $region9: #{tpu_custom_call.1} parent=5 // pred_check
        _
      $region10: #{tpu_custom_call.1} parent=5 // pred_check_branch
        %166 = sbr.rel (%p163) target = $region12
      $region11: #{tpu_custom_call.1} parent=5 // pred_region
        %s167 = ssub.s32 %s27, 1
      $region12: #{tpu_custom_call.1} parent=5 // pred_fallthru
        _
      %p168 = scmp.lt.s32.totalorder %s27, 2
      // Predicated region
      $region13: #{tpu_custom_call.1} parent=5 // pred_check
        %p169 = pneg %p168
      $region14: #{tpu_custom_call.1} parent=5 // pred_check_branch
        %171 = sbr.rel (%p169) target = $region16
      $region15: #{tpu_custom_call.1} parent=5 // pred_region
        // Predicated region
        $region17: #{tpu_custom_call.1} parent=15 // pred_check
          %p172 = pneg %p59
        $region18: #{tpu_custom_call.1} parent=15 // pred_check_branch
          %174 = sbr.rel (%p172) target = $region20
        $region19: #{tpu_custom_call.1} parent=15 // pred_region
          %s175 = sand.u32 %s49, 1
          %s176 = scalar_lea.sflag [#allocation5], %s175
          %s177 = sand.u32 %s49, 1
          %s178 = smul.addr %s177, 8
          %s179 = scalar_lea.vmem [#allocation4], %s178
          %s180 = smul.u32 2, %s35
          %182 = vsyncadd %s176, 0
          %s183 = smul.addr %s180, 4
          %s184 = scalar_lea.hbm %s1, %s183
          %s185 = sshll.u32 %s184, 4
          %s186 = int_to_ptr.hbm [resolvable:$true] %s185
          %s187 = sshll.u32 %s179, 4
          %s188 = int_to_ptr.vmem [resolvable:$true] %s187
          %193 = dma.hbm_to_vmem [thread:$0]  %s186, 128, %s188, %s176, 64, 64, 4
        $region20: #{tpu_custom_call.1} parent=15 // pred_fallthru
          _
        // Predicated region
        $region21: #{tpu_custom_call.1} parent=15 // pred_check
          %p194 = pneg %p89
        $region22: #{tpu_custom_call.1} parent=15 // pred_check_branch
          %196 = sbr.rel (%p194) target = $region24
        $region23: #{tpu_custom_call.1} parent=15 // pred_region
          %s197 = sand.u32 %s27, 1
          %s198 = scalar_lea.sflag [#allocation8], %s197
          %s199 = sand.u32 %s79, 1
          %s200 = smul.addr %s199, 64
          %s201 = scalar_lea.vmem [#allocation7], %s200
          %s202 = sld [smem:[#allocation3 + %s35]]
          %204 = vsyncadd %s198, 0
          %s205 = smul.addr %s202, 16
          %s206 = sadd.s32 %s34, %s205
          %s207 = smul.addr %s206, 4
          %s208 = scalar_lea.hbm %s2, %s207
          %s209 = sshll.u32 %s208, 4
          %s210 = int_to_ptr.hbm [resolvable:$true] %s209
          %s211 = sshll.u32 %s201, 4
          %s212 = int_to_ptr.vmem [resolvable:$true] %s211
          %217 = dma.hbm_to_vmem [thread:$0]  %s210, 1024, %s212, %s198, 64, 64, 4
        $region24: #{tpu_custom_call.1} parent=15 // pred_fallthru
          _
        // Predicated region
        $region25: #{tpu_custom_call.1} parent=15 // pred_check
          %p218 = pneg %p119
        $region26: #{tpu_custom_call.1} parent=15 // pred_check_branch
          %220 = sbr.rel (%p218) target = $region28
        $region27: #{tpu_custom_call.1} parent=15 // pred_region
          %s221 = sand.u32 %s27, 1
          %s222 = scalar_lea.sflag [#allocation8], %s221
          %s223 = sand.u32 %s109, 1
          %s224 = scalar_lea.vmem [#allocation9], %s223
          %s225 = sld [smem:[#allocation3 + %s35]]
          %227 = vsyncadd %s222, 0
          %s228 = sadd.s32 %s34, %s225
          %s229 = scalar_lea.hbm %s3, %s228
          %s231 = sshll.u32 %s229, 4
          %s232 = int_to_ptr.hbm [resolvable:$true] %s231
          %s233 = sshll.u32 %s224, 4
          %s234 = int_to_ptr.vmem [resolvable:$true] %s233
          %236 = dma.hbm_to_vmem [thread:$0]  %s232, 16, %s234, %s222
        $region28: #{tpu_custom_call.1} parent=15 // pred_fallthru
          _
      $region16: #{tpu_custom_call.1} parent=5 // pred_fallthru
        _
      %p237 = scmp.le.s32.totalorder 1, %s27
      %p238 = scmp.lt.s32.totalorder %s27, 3
      %p239 = pnand %p237, %p238
      %p240 = pneg %p239
      // Predicated region
      $region29: #{tpu_custom_call.1} parent=5 // pred_check
        _
      $region30: #{tpu_custom_call.1} parent=5 // pred_check_branch
        %242 = sbr.rel (%p239) target = $region32
      $region31: #{tpu_custom_call.1} parent=5 // pred_region
        %s243 = ssub.s32 %s27, 1
        %s244 = sand.u32 %s52, 1
        %s245 = scalar_lea.sflag [#allocation5], %s244
        %s246 = sand.u32 %s52, 1
        %s247 = smul.addr %s246, 8
        %s248 = scalar_lea.vmem [#allocation4], %s247
        // Predicated region
        $region33: #{tpu_custom_call.1} parent=31 // pred_check
          %p249 = pneg %p65
        $region34: #{tpu_custom_call.1} parent=31 // pred_check_branch
          %251 = sbr.rel (%p249) target = $region36
        $region35: #{tpu_custom_call.1} parent=31 // pred_region
          %253 = dma.done %s245, 128
        $region36: #{tpu_custom_call.1} parent=31 // pred_fallthru
          _
        %s254 = sand.u32 %s32, 1
        %s255 = scalar_lea.sflag [#allocation8], %s254
        %s256 = sand.u32 %s82, 1
        %s257 = smul.addr %s256, 64
        %s258 = scalar_lea.vmem [#allocation7], %s257
        // Predicated region
        $region37: #{tpu_custom_call.1} parent=31 // pred_check
          %p259 = pneg %p95
        $region38: #{tpu_custom_call.1} parent=31 // pred_check_branch
          %261 = sbr.rel (%p259) target = $region40
        $region39: #{tpu_custom_call.1} parent=31 // pred_region
          %263 = dma.done %s255, 1024
        $region40: #{tpu_custom_call.1} parent=31 // pred_fallthru
          _
        %s264 = sand.u32 %s32, 1
        %s265 = scalar_lea.sflag [#allocation8], %s264
        %s266 = sand.u32 %s112, 1
        %s267 = scalar_lea.vmem [#allocation9], %s266
        // Predicated region
        $region41: #{tpu_custom_call.1} parent=31 // pred_check
          %p268 = pneg %p125
        $region42: #{tpu_custom_call.1} parent=31 // pred_check_branch
          %270 = sbr.rel (%p268) target = $region44
        $region43: #{tpu_custom_call.1} parent=31 // pred_region
          %272 = dma.done %s265, 16
        $region44: #{tpu_custom_call.1} parent=31 // pred_fallthru
          _
        %s273 = sand.u32 %s52, 1
        %s274 = scalar_lea.sflag [#allocation5], %s273
        %s275 = sand.u32 %s52, 1
        %s276 = smul.addr %s275, 8
        %s277 = scalar_lea.vmem [#allocation4], %s276
        %p278 = pneg %p65
        %p279 = pneg %p62
        %s280 = sand.u32 %s32, 1
        %s281 = scalar_lea.sflag [#allocation8], %s280
        %s282 = sand.u32 %s82, 1
        %s283 = smul.addr %s282, 64
        %s284 = scalar_lea.vmem [#allocation7], %s283
        %p285 = pneg %p95
        %p286 = pneg %p92
        %s287 = sand.u32 %s32, 1
        %s288 = scalar_lea.sflag [#allocation8], %s287
        %s289 = sand.u32 %s112, 1
        %s290 = scalar_lea.vmem [#allocation9], %s289
        %p291 = pneg %p125
        %p292 = pneg %p122
        %p293 = pneg %p153
        %p294 = pneg %p150
        %s295 = sand.u32 %s140, 1
        %s296 = scalar_lea.sflag [#allocation6], %s295
        %s297 = sand.u32 %s140, 1
        %s298 = smul.addr %s297, 8
        %s299 = scalar_lea.vmem [#allocation10], %s298
        %s300 = smul.u32 2, %s37
        %s301 = sld [smem:[#allocation3 + %s37]]
        %s302 = sld [smem:[#allocation3 + %s37]]
        %s303 = smul.u32 2, %s37
        %v304 = vld [vmem:[%s248] sm:$0xf]
        %v305 = vld [vmem:[%s248 + $0x4] sm:$0xf]
        %v306 = vld [vmem:[%s258] sm:$0xf]
        %v307 = vld [vmem:[%s258 + $0x4] sm:$0xf]
        %v308 = vld [vmem:[%s258 + $0x8] sm:$0xf]
        %v309 = vld [vmem:[%s258 + $0xc] sm:$0xf]
        %v310 = vld [vmem:[%s258 + $0x10] sm:$0xf]
        %v311 = vld [vmem:[%s258 + $0x14] sm:$0xf]
        %v312 = vld [vmem:[%s258 + $0x18] sm:$0xf]
        %v313 = vld [vmem:[%s258 + $0x1c] sm:$0xf]
        %v314 = vld [vmem:[%s258 + $0x20] sm:$0xf]
        %v315 = vld [vmem:[%s258 + $0x24] sm:$0xf]
        %v316 = vld [vmem:[%s258 + $0x28] sm:$0xf]
        %v317 = vld [vmem:[%s258 + $0x2c] sm:$0xf]
        %v318 = vld [vmem:[%s258 + $0x30] sm:$0xf]
        %v319 = vld [vmem:[%s258 + $0x34] sm:$0xf]
        %v320 = vld [vmem:[%s258 + $0x38] sm:$0xf]
        %v321 = vld [vmem:[%s258 + $0x3c] sm:$0xf]
        %v322 = vld [vmem:[%s267] sm:$0x1]
        %v324 = vperm.slane %v322, 0
        %v328 = vunpack.c.l.b16 %v304
        %v329 = vunpack.c.l.b16 %v305
        %v330 = vpack.c.b16 %v329, %v328
        %v348 = vunpack.c.l.b16 %v306
        %v349 = vunpack.c.l.b16 %v307
        %v350 = vunpack.c.l.b16 %v308
        %v351 = vunpack.c.l.b16 %v309
        %v352 = vunpack.c.l.b16 %v310
        %v353 = vunpack.c.l.b16 %v311
        %v354 = vunpack.c.l.b16 %v312
        %v355 = vunpack.c.l.b16 %v313
        %v356 = vunpack.c.l.b16 %v314
        %v357 = vunpack.c.l.b16 %v315
        %v358 = vunpack.c.l.b16 %v316
        %v359 = vunpack.c.l.b16 %v317
        %v360 = vunpack.c.l.b16 %v318
        %v361 = vunpack.c.l.b16 %v319
        %v362 = vunpack.c.l.b16 %v320
        %v363 = vunpack.c.l.b16 %v321
        %v364 = vpack.c.b16 %v349, %v348
        %v365 = vpack.c.b16 %v351, %v350
        %v366 = vpack.c.b16 %v353, %v352
        %v367 = vpack.c.b16 %v355, %v354
        %v368 = vpack.c.b16 %v357, %v356
        %v369 = vpack.c.b16 %v359, %v358
        %v370 = vpack.c.b16 %v361, %v360
        %v371 = vpack.c.b16 %v363, %v362
        %380 = vmatpush.bf16.msra.mxu0 %v371
        %381 = vmatpush.bf16.msra.mxu0 %v370
        %382 = vmatpush.bf16.msra.mxu0 %v369
        %383 = vmatpush.bf16.msra.mxu0 %v368
        %384 = vmatpush.bf16.msra.mxu0 %v367
        %385 = vmatpush.bf16.msra.mxu0 %v366
        %386 = vmatpush.bf16.msra.mxu0 %v365
        %387 = vmatpush.bf16.msra.mxu0 %v364
        %388 = vmatmul.bf16.gmra.mxu0 %v330
        %v389 = vpop.f32.mrf.mxu0
        %v390 = vadd.f32 %v324, %v389
        %v391 = vpop.f32.mrf.mxu0
        %v392 = vadd.f32 %v324, %v391
        %393 = vdwg.mxu0
        %v394 = vpack.c.bf16 %v390, %v390
        %v395 = vpack.c.bf16 %v392, %v392
        %396 = vst [vmem:[%s299] sm:$0xf] %v394
        %397 = vst [vmem:[%s299 + $0x4] sm:$0xf] %v395
        %s398 = sand.u32 %s140, 1
        %s399 = scalar_lea.sflag [#allocation6], %s398
        %s400 = sand.u32 %s140, 1
        %s401 = smul.addr %s400, 8
        %s402 = scalar_lea.vmem [#allocation10], %s401
        // Predicated region
        $region45: #{tpu_custom_call.1} parent=31 // pred_check
          %p403 = pneg %p150
        $region46: #{tpu_custom_call.1} parent=31 // pred_check_branch
          %405 = sbr.rel (%p403) target = $region48
        $region47: #{tpu_custom_call.1} parent=31 // pred_region
          %s406 = smul.u32 2, %s37
          %408 = vsyncadd %s399, 0
          %s409 = sadd.s32 %s36, %s406
          %s410 = smul.addr %s409, 4
          %s411 = scalar_lea.hbm %s4, %s410
          %s412 = sshll.u32 %s402, 4
          %s413 = int_to_ptr.vmem [resolvable:$true] %s412
          %s414 = sshll.u32 %s411, 4
          %s415 = int_to_ptr.hbm [resolvable:$true] %s414
          %420 = dma.vmem_to_hbm [thread:$0]  %s413, 128, %s415, %s399, 64, 64, 4
        $region48: #{tpu_custom_call.1} parent=31 // pred_fallthru
          _
      $region32: #{tpu_custom_call.1} parent=5 // pred_fallthru
        _
      %p421 = scmp.le.s32.totalorder 2, %s27
      // Predicated region
      $region49: #{tpu_custom_call.1} parent=5 // pred_check
        %p422 = pneg %p421
      $region50: #{tpu_custom_call.1} parent=5 // pred_check_branch
        %424 = sbr.rel (%p422) target = $region52
      $region51: #{tpu_custom_call.1} parent=5 // pred_region
        %s425 = ssub.s32 %s27, 2
        // Predicated region
        $region53: #{tpu_custom_call.1} parent=51 // pred_check
          %p426 = pneg %p156
        $region54: #{tpu_custom_call.1} parent=51 // pred_check_branch
          %428 = sbr.rel (%p426) target = $region56
        $region55: #{tpu_custom_call.1} parent=51 // pred_region
          %s429 = sand.u32 %s141, 1
          %s430 = scalar_lea.sflag [#allocation6], %s429
          %s431 = sand.u32 %s141, 1
          %s432 = smul.addr %s431, 8
          %s433 = scalar_lea.vmem [#allocation10], %s432
          %435 = dma.done %s430, 128
        $region56: #{tpu_custom_call.1} parent=51 // pred_fallthru
          _
      $region52: #{tpu_custom_call.1} parent=5 // pred_fallthru
        _
    $region6: #{tpu_custom_call.1} parent=1 // loop_footer
      %s31 = sadd.s32 1, %s27
    $region7: #{tpu_custom_call.1} parent=1 // loop_footer_branch
      %26 = sbr.rel target = $region3
    $region8: #{tpu_custom_call.1} parent=1 // loop_exit
      _
    %436 = vsyncpa [#allocation5], 1
    %s437 = scalar_lea.sflag [#allocation5], 1
    %438 = vsyncpa %s437, 1
    %439 = vsyncpa [#allocation8], 1
    %s440 = scalar_lea.sflag [#allocation8], 1
    %441 = vsyncpa %s440, 1
    %442 = vsyncpa [#allocation6], 1
    %s443 = scalar_lea.sflag [#allocation6], 1
    %444 = vsyncpa %s443, 1

</llo_original>
